<compile_context>
chip_gen: v7x
topology: tpu7x:2x2x1
jax: 0.10.0
libtpu: 0.0.40
codegen_flags: <defaults>
</compile_context>

<pallas_src>
import functools

import jax
import jax.numpy as jnp
from jax.experimental import pallas as pl
from jax.experimental.pallas import tpu as pltpu


def _round_up(x, m):
    return -(-x // m) * m


def _padded_tile_bytes(rows, cols, itemsize):
    sub = max(8, 32 // itemsize)  # sublane multiple: 8 f32 / 16 bf16 / 32 int8
    return _round_up(max(rows, 1), sub) * _round_up(max(cols, 1), 128) * itemsize


def _vmem_config():
    """(per-step block budget, vmem_limit_bytes), derived from VMEM capacity."""
    cap = 64 * 1024 * 1024  # conservative default (v7x-class per-TC VMEM)
    try:
        cap = int(getattr(pltpu.get_tpu_info(), "vmem_capacity_bytes", cap)) or cap
    except Exception:
        pass
    if cap >= 96 * 1024 * 1024:            # v5e / v6e: 128 MiB VMEM
        return 8 * 1024 * 1024, 64 * 1024 * 1024
    return 4 * 1024 * 1024, 32 * 1024 * 1024


def _choose_batch_block(B, S, D, Dv, itemsize, step_budget_bytes):
    """Pick TB: a sublane-aligned multiple that divides B and keeps one grid step's
    padded, double-buffered blocks under the budget. Prefers >= 2 grid steps and an
    even step count (v7x 2-TC balance); falls back to TB = B (always-legal blocks)."""
    align = max(8, 32 // itemsize)
    if B <= align:
        return B
    cands = [tb for tb in range(align, B + 1, align) if B % tb == 0]
    if not cands:
        return B  # no aligned divisor; full-batch blocks are always legal
    # padded VMEM bytes per batch element, x2 for double-buffered pipelining
    per_b = 2 * (_padded_tile_bytes(S, D, itemsize)        # K block
                 + _padded_tile_bytes(S, Dv, itemsize)     # V block
                 + _padded_tile_bytes(1, D, itemsize)      # q row
                 + _round_up(S, 128) * itemsize            # attn row (dense slab)
                 + _round_up(Dv, 128) * itemsize)          # out row (dense slab)
    cap = max(1, step_budget_bytes // max(per_b, 1))
    feasible = [tb for tb in cands if tb <= cap] or [cands[0]]
    multi = [tb for tb in feasible if B // tb >= 2]         # >= 2 steps when possible
    pool = multi or feasible
    even = [tb for tb in pool if (B // tb) % 2 == 0]        # even step count preferred
    pool = even or pool
    return max(pool)


def _sdpa_kernel(q_ref, k_ref, v_ref, out_ref, attn_ref, *, inv_temperature):
    # q_ref: (TB, 1, D); k_ref: (TB, S, D); v_ref: (TB, S, Dv)
    # out_ref: (TB, Dv); attn_ref: (TB, S)   -- dense slabs, TB on sublanes
    tb, s_len = attn_ref.shape
    dv = out_ref.shape[-1]

    q = q_ref[...] * inv_temperature   # fold 1/temperature into q (D elems, not S)
    k = k_ref[...]
    v = v_ref[...]

    # scores on the MXU: batched (1,D)x(D,S), f32 accumulation, no K transpose.
    s3 = jnp.einsum("bqd,bkd->bqk", q, k,
                    preferred_element_type=jnp.float32)        # (TB, 1, S)
    s = s3.reshape(tb, s_len)                                   # dense (TB, S)

    # numerically stable, exact softmax over the sequence axis (PyTorch dim=2)
    m = jnp.max(s, axis=-1, keepdims=True)
    e = jnp.exp(s - m)
    p = e / jnp.sum(e, axis=-1, keepdims=True)                  # rows sum to 1
    attn_ref[...] = p.astype(attn_ref.dtype)

    # output on the MXU: batched (1,S)x(S,Dv), f32 accumulation.
    o3 = jnp.einsum("bqk,bkd->bqd", p.reshape(tb, 1, s_len).astype(v.dtype), v,
                    preferred_element_type=jnp.float32)         # (TB, 1, Dv)
    out_ref[...] = o3.reshape(tb, dv).astype(out_ref.dtype)


def scaled_dot_product_attention(q, k, v, temperature):
    """q: (B, D), k: (B, S, D), v: (B, S, Dv) -> (out (B,1,Dv), attn (B,1,S))."""
    B, D = q.shape
    _, S, Dk = k.shape
    _, _, Dv = v.shape
    assert Dk == D and k.shape[0] == B and v.shape[:2] == (B, S)

    itemsize = max(jnp.dtype(q.dtype).itemsize,
                   jnp.dtype(k.dtype).itemsize,
                   jnp.dtype(v.dtype).itemsize)
    step_budget, vmem_limit = _vmem_config()
    TB = _choose_batch_block(B, S, D, Dv, itemsize, step_budget)
    grid = (B // TB,)   # TB divides B (or equals B), so this is exact

    q3 = q[:, None, :]  # (B, 1, D): wrapper-side layout plumbing (free)

    kernel = functools.partial(_sdpa_kernel,
                               inv_temperature=1.0 / float(temperature))

    out_shapes = (
        jax.ShapeDtypeStruct((B, Dv), q.dtype),   # output (dense slab)
        jax.ShapeDtypeStruct((B, S), q.dtype),    # attention weights (dense slab)
    )

    grid_spec = pltpu.PrefetchScalarGridSpec(
        num_scalar_prefetch=0,
        grid=grid,
        in_specs=[
            pl.BlockSpec((TB, 1, D), lambda b: (b, 0, 0)),
            pl.BlockSpec((TB, S, D), lambda b: (b, 0, 0)),
            pl.BlockSpec((TB, S, Dv), lambda b: (b, 0, 0)),
        ],
        out_specs=[
            pl.BlockSpec((TB, Dv), lambda b: (b, 0)),
            pl.BlockSpec((TB, S), lambda b: (b, 0)),
        ],
    )

    out2, attn2 = pl.pallas_call(
        kernel,
        out_shape=out_shapes,
        grid_spec=grid_spec,
        compiler_params=pltpu.CompilerParams(
            dimension_semantics=("parallel",),
            vmem_limit_bytes=vmem_limit,
        ),
    )(q3, k, v)

    # match the PyTorch module's (B, 1, .) outputs (free layout plumbing)
    return out2[:, None, :], attn2[:, None, :]


if __name__ == "__main__":
    # Small deterministic shapes consistent with the module's forward.
    B, S, D = 2, 8, 32
    temperature = float(jnp.sqrt(jnp.float32(D)))

    key = jax.random.PRNGKey(0)
    kq, kk, kv = jax.random.split(key, 3)
    q = jax.random.normal(kq, (B, D), dtype=jnp.float32)
    k = jax.random.normal(kk, (B, S, D), dtype=jnp.float32)
    v = jax.random.normal(kv, (B, S, D), dtype=jnp.float32)

    out, attn = scaled_dot_product_attention(q, k, v, temperature)
    out = jax.block_until_ready(out)
    attn = jax.block_until_ready(attn)

    # Pure-JAX reference.
    s_ref = jnp.einsum("bd,bsd->bs", q, k) / temperature
    attn_ref = jax.nn.softmax(s_ref, axis=-1)[:, None, :]      # (B, 1, S)
    out_ref = jnp.einsum("bqs,bsd->bqd", attn_ref, v)          # (B, 1, D)

    assert out.shape == (B, 1, D) and attn.shape == (B, 1, S)
    assert jnp.allclose(attn, attn_ref, atol=1e-4, rtol=1e-4)
    assert jnp.allclose(out, out_ref, atol=1e-4, rtol=1e-4)

    print("KERNEL_OK")
</pallas_src>

<mosaic_0001>
module attributes {stable_mosaic.version = 11 : i64} {
  func.func @_sdpa_kernel(%arg0: i32, %arg1: memref<2x1x32xf32, #tpu.memory_space<vmem>>, %arg2: memref<2x8x32xf32, #tpu.memory_space<vmem>>, %arg3: memref<2x8x32xf32, #tpu.memory_space<vmem>>, %arg4: memref<2x32xf32, #tpu.memory_space<vmem>>, %arg5: memref<2x8xf32, #tpu.memory_space<vmem>>) attributes {dimension_semantics = [#tpu.dimension_semantics<parallel>], iteration_bounds = array<i64: 1>, scalar_prefetch = 0 : i64, scratch_operands = 0 : i64, tpu.core_type = #tpu.core_type<tc>, window_params = [{transform_indices = @transform_0, window_bounds = array<i64: 2, 1, 32>}, {transform_indices = @transform_1, window_bounds = array<i64: 2, 8, 32>}, {transform_indices = @transform_2, window_bounds = array<i64: 2, 8, 32>}, {transform_indices = @transform_3, window_bounds = array<i64: 2, 32>}, {transform_indices = @transform_4, window_bounds = array<i64: 2, 8>}]} {
    %c0 = arith.constant 0 : index
    %c0_0 = arith.constant 0 : index
    %c0_1 = arith.constant 0 : index
    %0 = vector.load %arg1[%c0, %c0_0, %c0_1] : memref<2x1x32xf32, #tpu.memory_space<vmem>>, vector<2x1x32xf32>
    %cst = arith.constant 0.176776692 : f32
    %1 = vector.broadcast %cst : f32 to vector<2x1x32xf32>
    %2 = arith.mulf %0, %1 : vector<2x1x32xf32>
    %c0_2 = arith.constant 0 : index
    %c0_3 = arith.constant 0 : index
    %c0_4 = arith.constant 0 : index
    %3 = vector.load %arg2[%c0_2, %c0_3, %c0_4] : memref<2x8x32xf32, #tpu.memory_space<vmem>>, vector<2x8x32xf32>
    %c0_5 = arith.constant 0 : index
    %c0_6 = arith.constant 0 : index
    %c0_7 = arith.constant 0 : index
    %4 = vector.load %arg3[%c0_5, %c0_6, %c0_7] : memref<2x8x32xf32, #tpu.memory_space<vmem>>, vector<2x8x32xf32>
    "tpu.trace_start"() <{level = 10 : i32, message = "bqd,bkd->bqk"}> : () -> ()
    %cst_8 = arith.constant dense<0.000000e+00> : vector<2x1x8xf32>
    %5 = tpu.matmul %2, %3, %cst_8 {dimension_numbers = #tpu.dot_dimension_numbers<[2], [2], [1], [1], [0, 0, 0, 1, 1, 1], [0], [0]>} : vector<2x1x32xf32>, vector<2x8x32xf32>, vector<2x1x8xf32> -> vector<2x1x8xf32>
    "tpu.trace_stop"() : () -> ()
    %6 = vector.shape_cast %5 : vector<2x1x8xf32> to vector<2x8xf32>
    %cst_9 = arith.constant dense<0xFF800000> : vector<2xf32>
    %7 = vector.multi_reduction <maximumf>, %6, %cst_9 [1] : vector<2x8xf32> to vector<2xf32>
    %8 = vector.shape_cast %7 : vector<2xf32> to vector<2x1xf32>
    %9 = vector.broadcast %8 : vector<2x1xf32> to vector<2x8xf32>
    %10 = arith.subf %6, %9 : vector<2x8xf32>
    %11 = math.exp %10 : vector<2x8xf32>
    %cst_10 = arith.constant dense<0.000000e+00> : vector<2xf32>
    %12 = vector.multi_reduction <add>, %11, %cst_10 [1] : vector<2x8xf32> to vector<2xf32>
    %13 = vector.shape_cast %12 : vector<2xf32> to vector<2x1xf32>
    %14 = vector.broadcast %13 : vector<2x1xf32> to vector<2x8xf32>
    %15 = arith.divf %11, %14 : vector<2x8xf32>
    %c0_11 = arith.constant 0 : index
    %c0_12 = arith.constant 0 : index
    %16 = vector.load %arg5[%c0_11, %c0_12] : memref<2x8xf32, #tpu.memory_space<vmem>>, vector<2x8xf32>
    tpu.vector_store %arg5[%c0_11, %c0_12], %15 {strides = array<i32>} : memref<2x8xf32, #tpu.memory_space<vmem>>, vector<2x8xf32>,
    %17 = vector.shape_cast %15 : vector<2x8xf32> to vector<2x1x8xf32>
    "tpu.trace_start"() <{level = 10 : i32, message = "bqk,bkd->bqd"}> : () -> ()
    %cst_13 = arith.constant dense<0.000000e+00> : vector<2x1x32xf32>
    %18 = tpu.matmul %17, %4, %cst_13 {dimension_numbers = #tpu.dot_dimension_numbers<[2], [1], [1], [2], [0, 0, 0, 1, 1, 2], [0], [0]>} : vector<2x1x8xf32>, vector<2x8x32xf32>, vector<2x1x32xf32> -> vector<2x1x32xf32>
    "tpu.trace_stop"() : () -> ()
    %19 = vector.shape_cast %18 : vector<2x1x32xf32> to vector<2x32xf32>
    %c0_14 = arith.constant 0 : index
    %c0_15 = arith.constant 0 : index
    %20 = vector.load %arg4[%c0_14, %c0_15] : memref<2x32xf32, #tpu.memory_space<vmem>>, vector<2x32xf32>
    tpu.vector_store %arg4[%c0_14, %c0_15], %19 {strides = array<i32>} : memref<2x32xf32, #tpu.memory_space<vmem>>, vector<2x32xf32>,
    return
  }
  func.func @transform_0(%arg0: i32) -> (i32, i32, i32) {
    %c0_i32 = arith.constant 0 : i32
    %c0_i32_0 = arith.constant 0 : i32
    %c0_i32_1 = arith.constant 0 : i32
    return %arg0, %c0_i32, %c0_i32_0 : i32, i32, i32
  }
  func.func @transform_1(%arg0: i32) -> (i32, i32, i32) {
    %c0_i32 = arith.constant 0 : i32
    %c0_i32_0 = arith.constant 0 : i32
    %c0_i32_1 = arith.constant 0 : i32
    return %arg0, %c0_i32, %c0_i32_0 : i32, i32, i32
  }
  func.func @transform_2(%arg0: i32) -> (i32, i32, i32) {
    %c0_i32 = arith.constant 0 : i32
    %c0_i32_0 = arith.constant 0 : i32
    %c0_i32_1 = arith.constant 0 : i32
    return %arg0, %c0_i32, %c0_i32_0 : i32, i32, i32
  }
  func.func @transform_3(%arg0: i32) -> (i32, i32) {
    %c0_i32 = arith.constant 0 : i32
    %c0_i32_0 = arith.constant 0 : i32
    return %arg0, %c0_i32 : i32, i32
  }
  func.func @transform_4(%arg0: i32) -> (i32, i32) {
    %c0_i32 = arith.constant 0 : i32
    %c0_i32_0 = arith.constant 0 : i32
    return %arg0, %c0_i32 : i32, i32
  }
}

</mosaic_0001>

<llo_original>
// kernel: tpu_custom_call.1
$region0: #{tpu_custom_call.1}
  #allocation0 [shape = 'u32[]', space=smem, size = 0x4, offset = 0x4, fixed_abs, tag = 'smem constant byte address 0x4 - core index']
  #allocation1 [shape = 'u32[144,128]{1,0:T(1,128)}', space=vmem, size = 0x12000, scoped, tag = 'internal scratch']
  %s0 = inlined_call_operand.hbm [shape: f32[2,1,32], index: 0, kind: input, shape index: {}]
  %s1 = inlined_call_operand.hbm [shape: f32[2,8,32], index: 1, kind: input, shape index: {}]
  %s2 = inlined_call_operand.hbm [shape: f32[2,8,32], index: 2, kind: input, shape index: {}]
  %s3 = inlined_call_operand.hbm [shape: f32[2,32], index: 3, kind: output, shape index: {0}]
  %s4 = inlined_call_operand.hbm [shape: f32[2,8], index: 4, kind: output, shape index: {1}]
  %5 = xla_tuple %s3, %s4
  %s6 = sld [smem:[#allocation0]]
  $region42: #{tpu_custom_call.1} parent=0
    _
  %s8 = ssub.s32 1, %s6
  %s9 = scalar_select 0, %s8, %s6
  $region1: #{tpu_custom_call.1} parent=0
    #allocation2 [shape = 'u8[1024]{0}', space=vmem, size = 0x400, scoped, tag = 'input window, operand 0, single buffered']
    #allocation3 [shape = 's32[1]{0}', space=sflag, size = 0x4, scoped, tag = 'scoped memory for tpu_custom_call.1']
    #allocation4 [shape = 's32[1]{0}', space=sflag, size = 0x4, scoped, tag = 'scoped memory for tpu_custom_call.1']
    #allocation5 [shape = 'u8[8192]{0}', space=vmem, size = 0x2000, scoped, tag = 'input window, operand 1, single buffered']
    #allocation6 [shape = 's32[1]{0}', space=sflag, size = 0x4, scoped, tag = 'scoped memory for tpu_custom_call.1']
    #allocation7 [shape = 'u8[8192]{0}', space=vmem, size = 0x2000, scoped, tag = 'input window, operand 2, single buffered']
    #allocation8 [shape = 'u8[1024]{0}', space=vmem, size = 0x400, scoped, tag = 'output window, operand 0, single buffered']
    #allocation9 [shape = 'u8[1024]{0}', space=vmem, size = 0x400, scoped, tag = 'output window, operand 1, single buffered']
    #allocation10 [shape = 's32[1]{0}', space=sflag, size = 0x4, scoped, tag = 'scoped memory for tpu_custom_call.1']
    %10 = vsyncpa [#allocation3], 0
    %11 = vsyncpa [#allocation6], 0
    %12 = vsyncpa [#allocation4], 0
    %13 = vsyncpa [#allocation10], 0
    // Predicated region
    $region2: #{tpu_custom_call.1} parent=1 // pred_check
      _
    $region3: #{tpu_custom_call.1} parent=1 // pred_check_branch
      %15 = sbr.rel (0) target = $region5
    $region4: #{tpu_custom_call.1} parent=1 // pred_region
      %s17 = ssub.s32 32, 32
      %18 = vsyncadd [#allocation3], %s17
      %s19 = sshll.u32 [#allocation2], 4
      %s20 = int_to_ptr.vmem [resolvable:$true] %s19
      %25 = dma.hbm_to_vmem [thread:$0]  %s0, 32, %s20, [#allocation3], 16, 16, 1
    $region5: #{tpu_custom_call.1} parent=1 // pred_fallthru
      _
    // Predicated region
    $region6: #{tpu_custom_call.1} parent=1 // pred_check
      _
    $region7: #{tpu_custom_call.1} parent=1 // pred_check_branch
      %27 = sbr.rel (0) target = $region9
    $region8: #{tpu_custom_call.1} parent=1 // pred_region
      %s29 = ssub.s32 256, 256
      %30 = vsyncadd [#allocation6], %s29
      %s31 = sshll.u32 [#allocation5], 4
      %s32 = int_to_ptr.vmem [resolvable:$true] %s31
      %37 = dma.hbm_to_vmem [thread:$0]  %s1, 256, %s32, [#allocation6], 128, 128, 8
    $region9: #{tpu_custom_call.1} parent=1 // pred_fallthru
      _
    // Predicated region
    $region10: #{tpu_custom_call.1} parent=1 // pred_check
      _
    $region11: #{tpu_custom_call.1} parent=1 // pred_check_branch
      %39 = sbr.rel (0) target = $region13
    $region12: #{tpu_custom_call.1} parent=1 // pred_region
      %s41 = ssub.s32 256, 256
      %42 = vsyncadd [#allocation6], %s41
      %s43 = sshll.u32 [#allocation7], 4
      %s44 = int_to_ptr.vmem [resolvable:$true] %s43
      %49 = dma.hbm_to_vmem [thread:$0]  %s2, 256, %s44, [#allocation6], 128, 128, 8
    $region13: #{tpu_custom_call.1} parent=1 // pred_fallthru
      _
    // Predicated region
    $region14: #{tpu_custom_call.1} parent=1 // pred_check
      _
    $region15: #{tpu_custom_call.1} parent=1 // pred_check_branch
      %51 = sbr.rel (0) target = $region17
    $region16: #{tpu_custom_call.1} parent=1 // pred_region
      %52 = dma.done [#allocation3], 32
    $region17: #{tpu_custom_call.1} parent=1 // pred_fallthru
      _
    // Predicated region
    $region18: #{tpu_custom_call.1} parent=1 // pred_check
      _
    $region19: #{tpu_custom_call.1} parent=1 // pred_check_branch
      %54 = sbr.rel (0) target = $region21
    $region20: #{tpu_custom_call.1} parent=1 // pred_region
      %55 = dma.done [#allocation6], 256
    $region21: #{tpu_custom_call.1} parent=1 // pred_fallthru
      _
    // Predicated region
    $region22: #{tpu_custom_call.1} parent=1 // pred_check
      _
    $region23: #{tpu_custom_call.1} parent=1 // pred_check_branch
      %57 = sbr.rel (0) target = $region25
    $region24: #{tpu_custom_call.1} parent=1 // pred_region
      %58 = dma.done [#allocation6], 256
    $region25: #{tpu_custom_call.1} parent=1 // pred_fallthru
      _
    %v59 = vld [vmem:[#allocation2] sm:$0x1]
    %v60 = vld [vmem:[#allocation2 + $0x1] sm:$0x1]
    %v61 = vmul.f32 %v59, 0.17677669
    %v62 = vmul.f32 %v60, 0.17677669
    %v63 = vld [vmem:[#allocation5] sm:$0xff]
    %v64 = vld [vmem:[#allocation5 + $0x8] sm:$0xff]
    %v65 = vld [vmem:[#allocation7] sm:$0xff]
    %v66 = vld [vmem:[#allocation7 + $0x8] sm:$0xff]
    %vm67 = vcmask 261120
    %v69 = vsel %vm67, %v61, 0
    %v72 = vsel %vm67, %v63, 0
    %74 = vmatprep.subr.mxu0 0.0
    %75 = vmatpush1.xpose.msra.mxu0 %v72
    %76 = vmatprep.subr.mxu0 0.0
    %77 = vmatpush1.xpose.msra.mxu0 0.0
    %78 = vmatprep.subr.mxu0 0.0
    %79 = vmatpush1.xpose.msra.mxu0 0.0
    %80 = vmatprep.subr.mxu0 0.0
    %81 = vmatpush1.xpose.msra.mxu0 0.0
    %82 = vmatprep.subr.mxu0 0.0
    %83 = vmatpush1.xpose.msra.mxu0 0.0
    %84 = vmatprep.subr.mxu0 0.0
    %85 = vmatpush1.xpose.msra.mxu0 0.0
    %86 = vmatprep.subr.mxu0 0.0
    %87 = vmatpush1.xpose.msra.mxu0 0.0
    %88 = vmatprep.subr.mxu0 0.0
    %89 = vmatpush1.xpose.msra.mxu0 0.0
    %90 = vmatprep.subr.mxu0 0.0
    %91 = vmatpush1.xpose.msra.mxu0 0.0
    %92 = vmatprep.subr.mxu0 0.0
    %93 = vmatpush1.xpose.msra.mxu0 0.0
    %94 = vmatprep.subr.mxu0 0.0
    %95 = vmatpush1.xpose.msra.mxu0 0.0
    %96 = vmatprep.subr.mxu0 0.0
    %97 = vmatpush1.xpose.msra.mxu0 0.0
    %98 = vmatprep.subr.mxu0 0.0
    %99 = vmatpush1.xpose.msra.mxu0 0.0
    %100 = vmatprep.subr.mxu0 0.0
    %101 = vmatpush1.xpose.msra.mxu0 0.0
    %102 = vmatprep.subr.mxu0 0.0
    %103 = vmatpush1.xpose.msra.mxu0 0.0
    %104 = vmatprep.subr.mxu0 0.0
    %105 = vmatpush1.xpose.msra.mxu0 0.0
    %106 = vmatprep.subr.mxu0 0.0
    %107 = vmatpush1.xpose.msra.mxu0 0.0
    %108 = vmatprep.subr.mxu0 0.0
    %109 = vmatpush1.xpose.msra.mxu0 0.0
    %110 = vmatprep.subr.mxu0 0.0
    %111 = vmatpush1.xpose.msra.mxu0 0.0
    %112 = vmatprep.subr.mxu0 0.0
    %113 = vmatpush1.xpose.msra.mxu0 0.0
    %114 = vmatprep.subr.mxu0 0.0
    %115 = vmatpush1.xpose.msra.mxu0 0.0
    %116 = vmatprep.subr.mxu0 0.0
    %117 = vmatpush1.xpose.msra.mxu0 0.0
    %118 = vmatprep.subr.mxu0 0.0
    %119 = vmatpush1.xpose.msra.mxu0 0.0
    %120 = vmatprep.subr.mxu0 0.0
    %121 = vmatpush1.xpose.msra.mxu0 0.0
    %122 = vmatprep.subr.mxu0 0.0
    %123 = vmatpush1.xpose.msra.mxu0 0.0
    %124 = vmatprep.subr.mxu0 0.0
    %125 = vmatpush1.xpose.msra.mxu0 0.0
    %126 = vmatprep.subr.mxu0 0.0
    %127 = vmatpush1.xpose.msra.mxu0 0.0
    %128 = vmatprep.subr.mxu0 0.0
    %129 = vmatpush1.xpose.msra.mxu0 0.0
    %130 = vmatprep.subr.mxu0 0.0
    %131 = vmatpush1.xpose.msra.mxu0 0.0
    %132 = vmatprep.subr.mxu0 0.0
    %133 = vmatpush1.xpose.msra.mxu0 0.0
    %134 = vmatprep.subr.mxu0 0.0
    %135 = vmatpush1.xpose.msra.mxu0 0.0
    %136 = vmatprep.subr.mxu0 0.0
    %137 = vmatpush1.xpose.msra.mxu0 0.0
    %138 = vmatprep.mubr.f32.mxu0 0.0
    %139 = vmatmul.mubr.f32.gmra.mrb[0].mxu0 %v69
    %v140 = vpop.f32.mrb[0].mxu0
    %v141 = vadd.f32 0.0, %v140
    %v142 = vpop.f32.mrb[0].mxu0
    %143 = vdwg.mxu0
    %v145 = vsel %vm67, %v62, 0
    %v148 = vsel %vm67, %v64, 0
    %150 = vmatprep.subr.mxu0 0.0
    %151 = vmatpush1.xpose.msra.mxu0 %v148
    %152 = vmatprep.subr.mxu0 0.0
    %153 = vmatpush1.xpose.msra.mxu0 0.0
    %154 = vmatprep.subr.mxu0 0.0
    %155 = vmatpush1.xpose.msra.mxu0 0.0
    %156 = vmatprep.subr.mxu0 0.0
    %157 = vmatpush1.xpose.msra.mxu0 0.0
    %158 = vmatprep.subr.mxu0 0.0
    %159 = vmatpush1.xpose.msra.mxu0 0.0
    %160 = vmatprep.subr.mxu0 0.0
    %161 = vmatpush1.xpose.msra.mxu0 0.0
    %162 = vmatprep.subr.mxu0 0.0
    %163 = vmatpush1.xpose.msra.mxu0 0.0
    %164 = vmatprep.subr.mxu0 0.0
    %165 = vmatpush1.xpose.msra.mxu0 0.0
    %166 = vmatprep.subr.mxu0 0.0
    %167 = vmatpush1.xpose.msra.mxu0 0.0
    %168 = vmatprep.subr.mxu0 0.0
    %169 = vmatpush1.xpose.msra.mxu0 0.0
    %170 = vmatprep.subr.mxu0 0.0
    %171 = vmatpush1.xpose.msra.mxu0 0.0
    %172 = vmatprep.subr.mxu0 0.0
    %173 = vmatpush1.xpose.msra.mxu0 0.0
    %174 = vmatprep.subr.mxu0 0.0
    %175 = vmatpush1.xpose.msra.mxu0 0.0
    %176 = vmatprep.subr.mxu0 0.0
    %177 = vmatpush1.xpose.msra.mxu0 0.0
    %178 = vmatprep.subr.mxu0 0.0
    %179 = vmatpush1.xpose.msra.mxu0 0.0
    %180 = vmatprep.subr.mxu0 0.0
    %181 = vmatpush1.xpose.msra.mxu0 0.0
    %182 = vmatprep.subr.mxu0 0.0
    %183 = vmatpush1.xpose.msra.mxu0 0.0
    %184 = vmatprep.subr.mxu0 0.0
    %185 = vmatpush1.xpose.msra.mxu0 0.0
    %186 = vmatprep.subr.mxu0 0.0
    %187 = vmatpush1.xpose.msra.mxu0 0.0
    %188 = vmatprep.subr.mxu0 0.0
    %189 = vmatpush1.xpose.msra.mxu0 0.0
    %190 = vmatprep.subr.mxu0 0.0
    %191 = vmatpush1.xpose.msra.mxu0 0.0
    %192 = vmatprep.subr.mxu0 0.0
    %193 = vmatpush1.xpose.msra.mxu0 0.0
    %194 = vmatprep.subr.mxu0 0.0
    %195 = vmatpush1.xpose.msra.mxu0 0.0
    %196 = vmatprep.subr.mxu0 0.0
    %197 = vmatpush1.xpose.msra.mxu0 0.0
    %198 = vmatprep.subr.mxu0 0.0
    %199 = vmatpush1.xpose.msra.mxu0 0.0
    %200 = vmatprep.subr.mxu0 0.0
    %201 = vmatpush1.xpose.msra.mxu0 0.0
    %202 = vmatprep.subr.mxu0 0.0
    %203 = vmatpush1.xpose.msra.mxu0 0.0
    %204 = vmatprep.subr.mxu0 0.0
    %205 = vmatpush1.xpose.msra.mxu0 0.0
    %206 = vmatprep.subr.mxu0 0.0
    %207 = vmatpush1.xpose.msra.mxu0 0.0
    %208 = vmatprep.subr.mxu0 0.0
    %209 = vmatpush1.xpose.msra.mxu0 0.0
    %210 = vmatprep.subr.mxu0 0.0
    %211 = vmatpush1.xpose.msra.mxu0 0.0
    %212 = vmatprep.subr.mxu0 0.0
    %213 = vmatpush1.xpose.msra.mxu0 0.0
    %214 = vmatprep.mubr.f32.mxu0 0.0
    %215 = vmatmul.mubr.f32.gmra.mrb[0].mxu0 %v145
    %v216 = vpop.f32.mrb[0].mxu0
    %v217 = vadd.f32 0.0, %v216
    %v218 = vpop.f32.mrb[0].mxu0
    %219 = vdwg.mxu0
    %v222 = vrot.slane %v217, 7
    %vm223 = vcmask 1041409
    %v224 = vsel %vm223, %v222, %v141
    %vm226 = vcmask 58368
    %v227 = vsel %vm226, %v224, -inf
    %228 = vmax.xlane.f32.xlu0 %v227
    %v229 = vpop.xlane.xlu0 %228
    %v231 = vrot.slane %v229, 1
    %v234 = vsub.f32 %v141, %v229
    %v235 = vsub.f32 %v217, %v231
    %v236 = vmul.f32 %v234, 1.442695
    %v237 = vpow.pop %v236
    %v238 = vmul.f32 %v235, 1.442695
    %v239 = vpow.pop %v238
    %v242 = vrot.slane %v239, 7
    %v243 = vsel %vm223, %v242, %v237
    %v245 = vsel %vm226, %v243, 0.0
    %246 = vadd.xlane.f32.xlu0 %v245
    %v247 = vpop.xlane.xlu0 %246
    %v249 = vrot.slane %v247, 1
    %v252 = vrcp.pop %v247
    %v253 = vmul.f32 %v237, %v252
    %v254 = vrcp.pop %v249
    %v255 = vmul.f32 %v239, %v254
    %v258 = vrot.slane %v255, 7
    %v259 = vsel %vm223, %v258, %v253
    %261 = vst.msk [vmem:[#allocation9] sm:$0x3] %vm226, %v259
    %vm262 = vcmask 64512
    %v263 = vsel %vm262, %v253, 0
    %265 = vmatprep.subr.mxu0 0.0
    %266 = vmatpush1.msra.mxu0 %v65
    %267 = vmatprep.subr.mxu0 0.0
    %268 = vmatpush1.msra.mxu0 0.0
    %269 = vmatprep.subr.mxu0 0.0
    %270 = vmatpush1.msra.mxu0 0.0
    %271 = vmatprep.subr.mxu0 0.0
    %272 = vmatpush1.msra.mxu0 0.0
    %273 = vmatprep.subr.mxu0 0.0
    %274 = vmatpush1.msra.mxu0 0.0
    %275 = vmatprep.subr.mxu0 0.0
    %276 = vmatpush1.msra.mxu0 0.0
    %277 = vmatprep.subr.mxu0 0.0
    %278 = vmatpush1.msra.mxu0 0.0
    %279 = vmatprep.subr.mxu0 0.0
    %280 = vmatpush1.msra.mxu0 0.0
    %281 = vmatprep.subr.mxu0 0.0
    %282 = vmatpush1.msra.mxu0 0.0
    %283 = vmatprep.subr.mxu0 0.0
    %284 = vmatpush1.msra.mxu0 0.0
    %285 = vmatprep.subr.mxu0 0.0
    %286 = vmatpush1.msra.mxu0 0.0
    %287 = vmatprep.subr.mxu0 0.0
    %288 = vmatpush1.msra.mxu0 0.0
    %289 = vmatprep.subr.mxu0 0.0
    %290 = vmatpush1.msra.mxu0 0.0
    %291 = vmatprep.subr.mxu0 0.0
    %292 = vmatpush1.msra.mxu0 0.0
    %293 = vmatprep.subr.mxu0 0.0
    %294 = vmatpush1.msra.mxu0 0.0
    %295 = vmatprep.subr.mxu0 0.0
    %296 = vmatpush1.msra.mxu0 0.0
    %297 = vmatprep.subr.mxu0 0.0
    %298 = vmatpush1.msra.mxu0 0.0
    %299 = vmatprep.subr.mxu0 0.0
    %300 = vmatpush1.msra.mxu0 0.0
    %301 = vmatprep.subr.mxu0 0.0
    %302 = vmatpush1.msra.mxu0 0.0
    %303 = vmatprep.subr.mxu0 0.0
    %304 = vmatpush1.msra.mxu0 0.0
    %305 = vmatprep.subr.mxu0 0.0
    %306 = vmatpush1.msra.mxu0 0.0
    %307 = vmatprep.subr.mxu0 0.0
    %308 = vmatpush1.msra.mxu0 0.0
    %309 = vmatprep.subr.mxu0 0.0
    %310 = vmatpush1.msra.mxu0 0.0
    %311 = vmatprep.subr.mxu0 0.0
    %312 = vmatpush1.msra.mxu0 0.0
    %313 = vmatprep.subr.mxu0 0.0
    %314 = vmatpush1.msra.mxu0 0.0
    %315 = vmatprep.subr.mxu0 0.0
    %316 = vmatpush1.msra.mxu0 0.0
    %317 = vmatprep.subr.mxu0 0.0
    %318 = vmatpush1.msra.mxu0 0.0
    %319 = vmatprep.subr.mxu0 0.0
    %320 = vmatpush1.msra.mxu0 0.0
    %321 = vmatprep.subr.mxu0 0.0
    %322 = vmatpush1.msra.mxu0 0.0
    %323 = vmatprep.subr.mxu0 0.0
    %324 = vmatpush1.msra.mxu0 0.0
    %325 = vmatprep.subr.mxu0 0.0
    %326 = vmatpush1.msra.mxu0 0.0
    %327 = vmatprep.subr.mxu0 0.0
    %328 = vmatpush1.msra.mxu0 0.0
    %329 = vmatprep.mubr.f32.mxu0 0.0
    %330 = vmatmul.mubr.f32.gmra.mrb[0].mxu0 %v263
    %v331 = vpop.f32.mrb[0].mxu0
    %v332 = vadd.f32 0.0, %v331
    %v333 = vpop.f32.mrb[0].mxu0
    %334 = vdwg.mxu0
    %v335 = vsel %vm262, %v255, 0
    %337 = vmatprep.subr.mxu0 0.0
    %338 = vmatpush1.msra.mxu0 %v66
    %339 = vmatprep.subr.mxu0 0.0
    %340 = vmatpush1.msra.mxu0 0.0
    %341 = vmatprep.subr.mxu0 0.0
    %342 = vmatpush1.msra.mxu0 0.0
    %343 = vmatprep.subr.mxu0 0.0
    %344 = vmatpush1.msra.mxu0 0.0
    %345 = vmatprep.subr.mxu0 0.0
    %346 = vmatpush1.msra.mxu0 0.0
    %347 = vmatprep.subr.mxu0 0.0
    %348 = vmatpush1.msra.mxu0 0.0
    %349 = vmatprep.subr.mxu0 0.0
    %350 = vmatpush1.msra.mxu0 0.0
    %351 = vmatprep.subr.mxu0 0.0
    %352 = vmatpush1.msra.mxu0 0.0
    %353 = vmatprep.subr.mxu0 0.0
    %354 = vmatpush1.msra.mxu0 0.0
    %355 = vmatprep.subr.mxu0 0.0
    %356 = vmatpush1.msra.mxu0 0.0
    %357 = vmatprep.subr.mxu0 0.0
    %358 = vmatpush1.msra.mxu0 0.0
    %359 = vmatprep.subr.mxu0 0.0
    %360 = vmatpush1.msra.mxu0 0.0
    %361 = vmatprep.subr.mxu0 0.0
    %362 = vmatpush1.msra.mxu0 0.0
    %363 = vmatprep.subr.mxu0 0.0
    %364 = vmatpush1.msra.mxu0 0.0
    %365 = vmatprep.subr.mxu0 0.0
    %366 = vmatpush1.msra.mxu0 0.0
    %367 = vmatprep.subr.mxu0 0.0
    %368 = vmatpush1.msra.mxu0 0.0
    %369 = vmatprep.subr.mxu0 0.0
    %370 = vmatpush1.msra.mxu0 0.0
    %371 = vmatprep.subr.mxu0 0.0
    %372 = vmatpush1.msra.mxu0 0.0
    %373 = vmatprep.subr.mxu0 0.0
    %374 = vmatpush1.msra.mxu0 0.0
    %375 = vmatprep.subr.mxu0 0.0
    %376 = vmatpush1.msra.mxu0 0.0
    %377 = vmatprep.subr.mxu0 0.0
    %378 = vmatpush1.msra.mxu0 0.0
    %379 = vmatprep.subr.mxu0 0.0
    %380 = vmatpush1.msra.mxu0 0.0
    %381 = vmatprep.subr.mxu0 0.0
    %382 = vmatpush1.msra.mxu0 0.0
    %383 = vmatprep.subr.mxu0 0.0
    %384 = vmatpush1.msra.mxu0 0.0
    %385 = vmatprep.subr.mxu0 0.0
    %386 = vmatpush1.msra.mxu0 0.0
    %387 = vmatprep.subr.mxu0 0.0
    %388 = vmatpush1.msra.mxu0 0.0
    %389 = vmatprep.subr.mxu0 0.0
    %390 = vmatpush1.msra.mxu0 0.0
    %391 = vmatprep.subr.mxu0 0.0
    %392 = vmatpush1.msra.mxu0 0.0
    %393 = vmatprep.subr.mxu0 0.0
    %394 = vmatpush1.msra.mxu0 0.0
    %395 = vmatprep.subr.mxu0 0.0
    %396 = vmatpush1.msra.mxu0 0.0
    %397 = vmatprep.subr.mxu0 0.0
    %398 = vmatpush1.msra.mxu0 0.0
    %399 = vmatprep.subr.mxu0 0.0
    %400 = vmatpush1.msra.mxu0 0.0
    %401 = vmatprep.mubr.f32.mxu0 0.0
    %402 = vmatmul.mubr.f32.gmra.mrb[0].mxu0 %v335
    %v403 = vpop.f32.mrb[0].mxu0
    %v404 = vadd.f32 0.0, %v403
    %v405 = vpop.f32.mrb[0].mxu0
    %406 = vdwg.mxu0
    %v409 = vrot.slane %v404, 7
    %v410 = vsel %vm223, %v409, %v332
    %vm412 = vcmask 254976
    %413 = vst.msk [vmem:[#allocation8] sm:$0x3] %vm412, %v410
    // Predicated region
    $region26: #{tpu_custom_call.1} parent=1 // pred_check
      _
    $region27: #{tpu_custom_call.1} parent=1 // pred_check_branch
      %415 = sbr.rel (0) target = $region29
    $region28: #{tpu_custom_call.1} parent=1 // pred_region
      %s417 = ssub.s32 32, 32
      %418 = vsyncadd [#allocation4], %s417
      %s420 = sshll.u32 [#allocation8], 4
      %s421 = int_to_ptr.vmem [resolvable:$true] %s420
      %423 = dma.vmem_to_hbm [thread:$0]  %s421, 32, %s3, [#allocation4]
    $region29: #{tpu_custom_call.1} parent=1 // pred_fallthru
      _
    // Predicated region
    $region30: #{tpu_custom_call.1} parent=1 // pred_check
      _
    $region31: #{tpu_custom_call.1} parent=1 // pred_check_branch
      %425 = sbr.rel (0) target = $region33
    $region32: #{tpu_custom_call.1} parent=1 // pred_region
      %s427 = ssub.s32 32, 32
      %428 = vsyncadd [#allocation10], %s427
      %s430 = sshll.u32 [#allocation9], 4
      %s431 = int_to_ptr.vmem [resolvable:$true] %s430
      %433 = dma.vmem_to_hbm [thread:$0]  %s431, 32, %s4, [#allocation10]
    $region33: #{tpu_custom_call.1} parent=1 // pred_fallthru
      _
    // Predicated region
    $region34: #{tpu_custom_call.1} parent=1 // pred_check
      _
    $region35: #{tpu_custom_call.1} parent=1 // pred_check_branch
      %435 = sbr.rel (0) target = $region37
    $region36: #{tpu_custom_call.1} parent=1 // pred_region
      %436 = dma.done [#allocation4], 32
    $region37: #{tpu_custom_call.1} parent=1 // pred_fallthru
      _
    // Predicated region
    $region38: #{tpu_custom_call.1} parent=1 // pred_check
      _
    $region39: #{tpu_custom_call.1} parent=1 // pred_check_branch
      %438 = sbr.rel (0) target = $region41
    $region40: #{tpu_custom_call.1} parent=1 // pred_region
      %439 = dma.done [#allocation10], 32
    $region41: #{tpu_custom_call.1} parent=1 // pred_fallthru
      _
    %440 = vsyncpa [#allocation3], 1
    %441 = vsyncpa [#allocation6], 1
    %442 = vsyncpa [#allocation4], 1
    %443 = vsyncpa [#allocation10], 1

</llo_original>
